<compile_context>
chip_gen: v7x
topology: tpu7x:2x2x1
jax: 0.10.0
libtpu: 0.0.40
codegen_flags: <defaults>
</compile_context>

<pallas_src>
import functools

import numpy as np

import jax
import jax.numpy as jnp
from jax import lax
from jax.experimental import pallas as pl
from jax.experimental.pallas import tpu as pltpu


STYLE_TEMPLATE = [
    'a painting in the style of {}', 'a rendering in the style of {}',
    'a cropped painting in the style of {}', 'the painting in the style of {}',
    'a clean painting in the style of {}', 'a dirty painting in the style of {}',
    'a dark painting in the style of {}', 'a picture in the style of {}',
    'a cool painting in the style of {}', 'a close-up painting in the style of {}',
    'a bright painting in the style of {}', 'a cropped painting in the style of {}',
    'a good painting in the style of {}', 'a close-up painting in the style of {}',
    'a rendition in the style of {}', 'a nice painting in the style of {}',
    'a small painting in the style of {}', 'a weird painting in the style of {}',
    'a large painting in the style of {}']

OBJECT_TEMPLATE = [
    'a photo of a {}', 'a rendering of a {}', 'a cropped photo of the {}',
    'the photo of a {}', 'a photo of a clean {}', 'a photo of a dirty {}',
    'a dark photo of the {}', 'a photo of my {}', 'a photo of the cool {}',
    'a close-up photo of a {}', 'a bright photo of the {}',
    'a cropped photo of a {}', 'a photo of the {}', 'a good photo of the {}',
    'a photo of one {}', 'a close-up photo of the {}', 'a rendition of the {}',
    'a photo of the clean {}', 'a rendition of a {}', 'a photo of a nice {}',
    'a good photo of a {}', 'a photo of the nice {}', 'a photo of the small {}',
    'a photo of the weird {}', 'a photo of the large {}', 'a photo of a cool {}',
    'a photo of a small {}']

HUMAN_TEMPLATE = [
    'a photo of a {}', 'a photo of one {}', 'a photo of the {}',
    'the photo of a {}', 'a rendering of a {}', 'a rendition of the {}',
    'a rendition of a {}', 'a cropped photo of the {}', 'a cropped photo of a {}',
    'a bad photo of the {}', 'a bad photo of a {}', 'a photo of a weird {}',
    'a weird photo of a {}', 'a bright photo of the {}', 'a good photo of the {}',
    'a photo of a nice {}', 'a good photo of a {}', 'a photo of a cool {}',
    'a bright photo of the {}']


_TILE = (8, 128)                 # one int32 vreg -> one unmasked lane-dense vst
_TILE_ELEMS = _TILE[0] * _TILE[1]


def _random_bits_kernel(seed_ref, bits_ref):
    """Fill one (8,128) int32 vreg with i.i.d. 31-bit random words.

    seed_ref : SMEM int32[1]      scalar seed (one stream per harvested batch)
    bits_ref : VMEM int32[8,128]  non-negative random words (mask 0x7FFFFFFF)

    Counter-based hash PRNG: x = hash(seed + golden_ratio * lane_id), using a
    lowbias32-style finalizer.  Pure add/xor/shift/mul on 32-bit ints so it
    lowers on the VPU and under interpret mode (no pltpu.prng_* primitives).
    """
    seed = seed_ref[0].astype(jnp.uint32)
    row = lax.broadcasted_iota(jnp.int32, _TILE, 0).astype(jnp.uint32)
    col = lax.broadcasted_iota(jnp.int32, _TILE, 1).astype(jnp.uint32)
    lane = row * jnp.uint32(_TILE[1]) + col + jnp.uint32(1)

    x = seed + lane * jnp.uint32(0x9E3779B9)      # decorrelate lanes
    x = x ^ (x >> 16)
    x = x * jnp.uint32(0x7FEB352D)
    x = x ^ (x >> 15)
    x = x * jnp.uint32(0x846CA68B)
    x = x ^ (x >> 16)
    x = x & jnp.uint32(0x7FFFFFFF)                # keep it exactly int32-safe
    bits_ref[...] = x.astype(jnp.int32)


# Built & compiled exactly once (seed shape/dtype is fixed), no per-call
# retracing of the Mosaic kernel.
_random_bits_tile = jax.jit(
    pl.pallas_call(
        _random_bits_kernel,
        out_shape=jax.ShapeDtypeStruct(_TILE, jnp.int32),
        in_specs=[pl.BlockSpec(memory_space=pltpu.MemorySpace.SMEM)],
        out_specs=pl.BlockSpec(memory_space=pltpu.MemorySpace.VMEM),
    )
)


def harvest_template_indices(seed, n_templates):
    """One kernel launch -> 1024 uniform indices in [0, n_templates) on host.

    Exact unsigned `% n` is applied on the host to the harvested words
    (bias <= n / 2**31, i.e. negligible and simpler than any in-kernel trick).
    """
    seed_arr = jnp.asarray(seed, dtype=jnp.int32).reshape((1,))
    tile = jax.block_until_ready(_random_bits_tile(seed_arr))
    bits = np.asarray(tile).reshape(-1)           # single device->host transfer
    return (bits % np.int64(n_templates)).astype(np.int64)


class EnhanceText:
    """Pallas/JAX port of mixofshow EnhanceText.

    NOTE: the random stream is deterministic in `seed`; each harvested batch
    of 1024 draws advances the seed by one (per-batch, not per-sample).
    """

    def __init__(self, enhance_type='object', seed=0):
        if enhance_type == 'object':
            self.templates = OBJECT_TEMPLATE
        elif enhance_type == 'style':
            self.templates = STYLE_TEMPLATE
        elif enhance_type == 'human':
            self.templates = HUMAN_TEMPLATE
        else:
            raise NotImplementedError(enhance_type)
        self._base_seed = int(seed)
        self._harvests = 0
        self._cache = None
        self._pos = 0

    def _refill(self):
        batch_seed = (self._base_seed + self._harvests) & 0x7FFFFFFF
        self._harvests += 1
        self._cache = harvest_template_indices(batch_seed, len(self.templates))
        self._pos = 0

    def _next_index(self):
        if self._cache is None or self._pos >= _TILE_ELEMS:
            self._refill()        # one kernel launch serves the next 1024 calls
        idx = int(self._cache[self._pos])
        self._pos += 1
        return idx

    def forward(self, img, **kwargs):
        concept_token = kwargs['prompts'].strip()
        idx = self._next_index()
        # TODO(synk): str.strip / str.format are host-side Python string ops
        # with no Pallas/TPU equivalent; only the random draw runs on-device.
        kwargs['prompts'] = self.templates[idx].format(concept_token)
        # img is returned untouched — zero extra HBM traffic, no copy kernel.
        return img, kwargs

    __call__ = forward


if __name__ == "__main__":
    key = jax.random.PRNGKey(0)

    # Small NCHW image consistent with the data-pipeline usage (pass-through).
    img = jax.random.normal(key, (2, 4, 16, 16), dtype=jnp.float32)

    transform = EnhanceText(enhance_type='object', seed=0)
    img_out, kwargs_out = transform(img, prompts='  dog ')
    img_out = jax.block_until_ready(img_out)

    # --- checks ---
    n = len(transform.templates)
    idx_a = harvest_template_indices(0, n)
    idx_b = harvest_template_indices(0, n)
    assert idx_a.shape == (_TILE_ELEMS,), "expected 1024 harvested indices"
    assert np.array_equal(idx_a, idx_b), "kernel not deterministic for a fixed seed"
    assert np.all((idx_a >= 0) & (idx_a < n)), "template index out of range"
    assert len(np.unique(idx_a)) > 1, "draws are degenerate (all identical)"
    assert kwargs_out['prompts'] == transform.templates[int(idx_a[0])].format('dog'), \
        "prompt does not match the chosen template"
    assert img_out is img and bool(jnp.array_equal(img_out, img)), \
        "image must pass through unchanged (zero-copy)"

    # Amortization: these calls are served from the host-side cache
    # (no additional kernel launches or device syncs).
    valid_cat = {t.format('cat') for t in transform.templates}
    for _ in range(16):
        _, kw = transform(img, prompts=' cat ')
        assert kw['prompts'] in valid_cat

    print("KERNEL_OK")
</pallas_src>

<mosaic_0001>
module attributes {stable_mosaic.version = 11 : i64} {
  func.func @_random_bits_kernel(%arg0: memref<1xi32, #tpu.memory_space<smem>>, %arg1: memref<8x128xi32, #tpu.memory_space<vmem>>) attributes {dimension_semantics = [], scalar_prefetch = 0 : i64, scratch_operands = 0 : i64, tpu.core_type = #tpu.core_type<tc>} {
    %c0 = arith.constant 0 : index
    %0 = memref.load %arg0[%c0] : memref<1xi32, #tpu.memory_space<smem>>
    %1 = tpu.iota {dimensions = array<i32: 0>} : vector<8x128xi32>
    %2 = tpu.iota {dimensions = array<i32: 1>} : vector<8x128xi32>
    %c128_i32 = arith.constant 128 : i32
    %3 = vector.broadcast %c128_i32 : i32 to vector<8x128xi32>
    %4 = arith.muli %1, %3 : vector<8x128xi32>
    %5 = arith.addi %4, %2 : vector<8x128xi32>
    %c1_i32 = arith.constant 1 : i32
    %6 = vector.broadcast %c1_i32 : i32 to vector<8x128xi32>
    %7 = arith.addi %5, %6 : vector<8x128xi32>
    %c-1640531527_i32 = arith.constant -1640531527 : i32
    %8 = vector.broadcast %c-1640531527_i32 : i32 to vector<8x128xi32>
    %9 = arith.muli %7, %8 : vector<8x128xi32>
    %10 = vector.broadcast %0 : i32 to vector<8x128xi32>
    %11 = arith.addi %10, %9 : vector<8x128xi32>
    %c16_i32 = arith.constant 16 : i32
    %12 = vector.broadcast %c16_i32 : i32 to vector<8x128xi32>
    %13 = arith.shrui %11, %12 : vector<8x128xi32>
    %14 = arith.xori %11, %13 : vector<8x128xi32>
    %c2146121005_i32 = arith.constant 2146121005 : i32
    %15 = vector.broadcast %c2146121005_i32 : i32 to vector<8x128xi32>
    %16 = arith.muli %14, %15 : vector<8x128xi32>
    %c15_i32 = arith.constant 15 : i32
    %17 = vector.broadcast %c15_i32 : i32 to vector<8x128xi32>
    %18 = arith.shrui %16, %17 : vector<8x128xi32>
    %19 = arith.xori %16, %18 : vector<8x128xi32>
    %c-2073254261_i32 = arith.constant -2073254261 : i32
    %20 = vector.broadcast %c-2073254261_i32 : i32 to vector<8x128xi32>
    %21 = arith.muli %19, %20 : vector<8x128xi32>
    %c16_i32_0 = arith.constant 16 : i32
    %22 = vector.broadcast %c16_i32_0 : i32 to vector<8x128xi32>
    %23 = arith.shrui %21, %22 : vector<8x128xi32>
    %24 = arith.xori %21, %23 : vector<8x128xi32>
    %c2147483647_i32 = arith.constant 2147483647 : i32
    %25 = vector.broadcast %c2147483647_i32 : i32 to vector<8x128xi32>
    %26 = arith.andi %24, %25 : vector<8x128xi32>
    %c0_1 = arith.constant 0 : index
    %c0_2 = arith.constant 0 : index
    %27 = vector.load %arg1[%c0_1, %c0_2] : memref<8x128xi32, #tpu.memory_space<vmem>>, vector<8x128xi32>
    tpu.vector_store %arg1[%c0_1, %c0_2], %26 {strides = array<i32>} : memref<8x128xi32, #tpu.memory_space<vmem>>, vector<8x128xi32>,
    return
  }
}

</mosaic_0001>

<llo_original>
// kernel: tpu_custom_call.1
$region0: #{tpu_custom_call.1}
  #allocation0 [shape = 'u32[]', space=smem, size = 0x4, offset = 0x4, fixed_abs, tag = 'smem constant byte address 0x4 - core index']
  #allocation1 [shape = 'u32[144,128]{1,0:T(1,128)}', space=vmem, size = 0x12000, scoped, tag = 'internal scratch']
  #allocation2 [shape = 's32[1]{0:T(128)S(6)}', space=smem, size = 0x200, scoped, tag = 'scoped memory for tpu_custom_call.1']
  %s0 = inlined_call_operand.<no memory space> [shape: s32[1], index: 0, kind: input, shape index: {}]
  %s1 = inlined_call_operand.hbm [shape: s32[8,128], index: 1, kind: output, shape index: {}]
  %s2 = sld [smem:[#allocation0]]
  $region14: #{tpu_custom_call.1} parent=0
    _
  %s4 = ssub.s32 1, %s2
  %s5 = scalar_select 0, %s4, %s2
  %6 = sst [smem:[#allocation2]] %s0
  $region1: #{tpu_custom_call.1} parent=0
    #allocation3 [shape = 'u8[4096]{0}', space=vmem, size = 0x1000, scoped, tag = 'output window, operand 0, single buffered']
    #allocation4 [shape = 's32[1]{0}', space=sflag, size = 0x4, scoped, tag = 'scoped memory for tpu_custom_call.1']
    %7 = vsyncpa [#allocation4], 0
    // Predicated region
    $region2: #{tpu_custom_call.1} parent=1 // pred_check
      _
    $region3: #{tpu_custom_call.1} parent=1 // pred_check_branch
      %9 = sbr.rel (0) target = $region5
    $region4: #{tpu_custom_call.1} parent=1 // pred_region
      _
    $region5: #{tpu_custom_call.1} parent=1 // pred_fallthru
      _
    %s10 = sld [smem:[#allocation2]]
    %v11 = vlaneseq
    %v12 = vshrl.u32 %v11, 7
    %v13 = vlaneseq
    %v14 = vand.u32 %v13, 127
    %v15 = vmul.u32 %v12, 128
    %v16 = vadd.s32 %v15, %v14
    %v17 = vadd.s32 %v16, 1
    %v18 = vmul.u32 %v17, 2654435769
    %v19 = vstv %s10
    %v20 = vadd.s32 %v19, %v18
    %v21 = vshrl.u32 %v20, 16
    %v22 = vxor.u32 %v20, %v21
    %v23 = vmul.u32 %v22, 2146121005
    %v24 = vshrl.u32 %v23, 15
    %v25 = vxor.u32 %v23, %v24
    %v26 = vmul.u32 %v25, 2221713035
    %v27 = vshrl.u32 %v26, 16
    %v28 = vxor.u32 %v26, %v27
    %v29 = vand.u32 %v28, 2147483647
    %30 = vst [vmem:[#allocation3] sm:$0xff] %v29
    // Predicated region
    $region6: #{tpu_custom_call.1} parent=1 // pred_check
      _
    $region7: #{tpu_custom_call.1} parent=1 // pred_check_branch
      %32 = sbr.rel (0) target = $region9
    $region8: #{tpu_custom_call.1} parent=1 // pred_region
      %s34 = ssub.s32 128, 128
      %35 = vsyncadd [#allocation4], %s34
      %s37 = sshll.u32 [#allocation3], 4
      %s38 = int_to_ptr.vmem [resolvable:$true] %s37
      %40 = dma.vmem_to_hbm [thread:$0]  %s38, 128, %s1, [#allocation4]
    $region9: #{tpu_custom_call.1} parent=1 // pred_fallthru
      _
    // Predicated region
    $region10: #{tpu_custom_call.1} parent=1 // pred_check
      _
    $region11: #{tpu_custom_call.1} parent=1 // pred_check_branch
      %42 = sbr.rel (0) target = $region13
    $region12: #{tpu_custom_call.1} parent=1 // pred_region
      %43 = dma.done [#allocation4], 128
    $region13: #{tpu_custom_call.1} parent=1 // pred_fallthru
      _
    %44 = vsyncpa [#allocation4], 1

</llo_original>
